<compile_context>
chip_gen: v5e
topology: v5e:2x2
jax: 0.10.0
libtpu: 0.0.40
codegen_flags: <defaults>
</compile_context>

<pallas_src>
import jax
import jax.numpy as jnp
from jax.experimental import pallas as pl
from jax.experimental.pallas import tpu as pltpu

HIDDEN = 20      # hidden_size
DIM_NODE = 2     # dim_node
BN_EPS = 1e-5
LANE = 128       # lane-dense feature padding target


def _round_up(x, m):
    return (x + m - 1) // m * m


def pick_n_pad(n):
    # Small graphs: pad to the 256-row tile only (nk == 1 fast path).
    # Large graphs: pad to lcm(TM, TK) = 2048 so (512, 2048) tiles divide evenly.
    return _round_up(n, 256) if n <= 2048 else _round_up(n, 2048)


def pick_tiles(n_pad):
    if n_pad <= 2048:
        return 256, n_pad          # nk == 1: whole contraction per grid step
    return 512, 2048               # ~2 MiB of bf16 A_hat streamed per grid step


# ---------------------------------------------------------------------------
# Shared kernel for both GCNConv aggregations:
#   o[i-tile] = sum_k A[i-tile, k-tile] @ p[k-tile]  (bf16 MXU, f32 acc),
#   + bias on the last k step.
# ---------------------------------------------------------------------------
def spmm_bias_kernel(a_ref, p_ref, b_ref, o_ref):
    k = pl.program_id(1)            # grid indices only at top level (interpret-safe)
    nk = pl.num_programs(1)

    @pl.when(k == 0)
    def _():
        o_ref[...] = jnp.zeros_like(o_ref)

    o_ref[...] += jnp.dot(a_ref[...], p_ref[...],
                          preferred_element_type=jnp.float32)

    @pl.when(k == nk - 1)
    def _():
        o_ref[...] += b_ref[...]


def _spmm_bias(a_pad, p_pad, b_pad, *, tm, tk):
    n_pad = a_pad.shape[0]
    ni, nk = n_pad // tm, n_pad // tk
    return pl.pallas_call(
        spmm_bias_kernel,
        out_shape=jax.ShapeDtypeStruct((n_pad, LANE), jnp.float32),
        grid_spec=pltpu.PrefetchScalarGridSpec(
            num_scalar_prefetch=0,
            grid=(ni, nk),
            in_specs=[
                pl.BlockSpec((tm, tk), lambda i, k: (i, k)),     # A_hat (bf16)
                pl.BlockSpec((tk, LANE), lambda i, k: (k, 0)),   # features (bf16)
                pl.BlockSpec((1, LANE), lambda i, k: (0, 0)),    # bias (f32)
            ],
            out_specs=pl.BlockSpec((tm, LANE), lambda i, k: (i, 0)),
        ),
        compiler_params=pltpu.CompilerParams(
            dimension_semantics=("parallel", "arbitrary"),
            vmem_limit_bytes=32 * 1024 * 1024,   # ~6 MiB actually used; v7x-safe
        ),
    )(a_pad, p_pad, b_pad)


# ---------------------------------------------------------------------------
# Full GCNLayer forward:
#   conv1 -> BatchNorm1d (training batch stats) -> ReLU -> conv2
# a_pad: (n_pad, n_pad) bf16 padded GCN-normalized adjacency.
# ---------------------------------------------------------------------------
def gcn_layer_forward(a_pad, x, params):
    f32 = jnp.float32
    n = x.shape[0]
    n_pad = a_pad.shape[0]
    tm, tk = pick_tiles(n_pad)
    assert a_pad.shape == (n_pad, n_pad)
    assert n_pad % tm == 0 and n_pad % tk == 0

    # --- stage 1: conv1 = A_hat @ (x W1^T) + b1 (lift hoisted, tiny) --------
    lift = (x.astype(f32) @ params["w1"].T).astype(jnp.bfloat16)          # [n, H]
    p1 = jnp.zeros((n_pad, LANE), jnp.bfloat16).at[:n, :HIDDEN].set(lift)
    b1 = jnp.zeros((1, LANE), f32).at[0, :HIDDEN].set(params["b1"])
    h = _spmm_bias(a_pad, p1, b1, tm=tm, tk=tk)                           # f32

    # --- BatchNorm1d (two-pass batch stats) + ReLU + W2 projection (tiny) ---
    hr = h[:n, :HIDDEN]
    mean = jnp.mean(hr, axis=0)
    var = jnp.mean(jnp.square(hr - mean), axis=0)        # biased, BN training mode
    rstd = jax.lax.rsqrt(var + BN_EPS)
    g = jnp.maximum((hr - mean) * rstd * params["gamma"] + params["beta"], 0.0)
    proj = (g @ params["w2"].T).astype(jnp.bfloat16)                      # [n, 2]
    p2 = jnp.zeros((n_pad, LANE), jnp.bfloat16).at[:n, :DIM_NODE].set(proj)
    b2 = jnp.zeros((1, LANE), f32).at[0, :DIM_NODE].set(params["b2"])

    # --- stage 2: conv2 = A_hat @ (relu(bn(h)) W2^T) + b2 -------------------
    out = _spmm_bias(a_pad, p2, b2, tm=tm, tk=tk)
    return out[:n, :DIM_NODE]


# ---------------------------------------------------------------------------
# Dense GCN-normalized adjacency from edge_index (PyG gcn_norm semantics),
# built directly at padded size in bf16 (no f32 N^2 round trip).
# ---------------------------------------------------------------------------
def build_gcn_adj_padded(edge_index, num_nodes, n_pad):
    self_loops = jnp.arange(num_nodes, dtype=edge_index.dtype)
    row = jnp.concatenate([edge_index[0], self_loops])     # source
    col = jnp.concatenate([edge_index[1], self_loops])     # target
    w = jnp.ones_like(row, dtype=jnp.float32)
    deg = jnp.zeros((num_nodes,), jnp.float32).at[col].add(w)
    dinv = jnp.where(deg > 0.0, jax.lax.rsqrt(deg), 0.0)
    norm = (dinv[row] * dinv[col]).astype(jnp.bfloat16)
    # out[col] += norm * x_lin[row]  =>  A_hat[col, row] = norm
    return jnp.zeros((n_pad, n_pad), jnp.bfloat16).at[col, row].add(norm)


def init_params(key):
    k1, k2 = jax.random.split(key, 2)
    scale = jnp.sqrt(2.0 / (HIDDEN + DIM_NODE))
    return dict(
        w1=jax.random.normal(k1, (HIDDEN, DIM_NODE), jnp.float32) * scale,
        b1=jnp.zeros((HIDDEN,), jnp.float32),
        w2=jax.random.normal(k2, (DIM_NODE, HIDDEN), jnp.float32) * scale,
        b2=jnp.zeros((DIM_NODE,), jnp.float32),
        gamma=jnp.ones((HIDDEN,), jnp.float32),
        beta=jnp.zeros((HIDDEN,), jnp.float32),
    )


# ---------------------------------------------------------------------------
# Pure-JAX f32 reference (same math) for a correctness check.
# ---------------------------------------------------------------------------
def reference_forward(a_hat, x, p):
    h = a_hat @ (x @ p["w1"].T) + p["b1"]
    mean = jnp.mean(h, axis=0, keepdims=True)
    var = jnp.mean((h - mean) ** 2, axis=0, keepdims=True)
    h = (h - mean) / jnp.sqrt(var + BN_EPS) * p["gamma"] + p["beta"]
    h = jnp.maximum(h, 0.0)
    return a_hat @ (h @ p["w2"].T) + p["b2"]


if __name__ == "__main__":
    key = jax.random.PRNGKey(0)
    kx, kp = jax.random.split(key)

    num_nodes = 256
    # Ring graph, both directions listed; edge_index: [2, 2N]
    src = jnp.arange(num_nodes, dtype=jnp.int32)
    dst = (src + 1) % num_nodes
    edge_index = jnp.concatenate(
        [jnp.stack([src, dst]), jnp.stack([dst, src])], axis=1)

    x = jax.random.normal(kx, (num_nodes, DIM_NODE), jnp.float32)   # data.x
    params = init_params(kp)

    n_pad = pick_n_pad(num_nodes)
    a_pad = build_gcn_adj_padded(edge_index, num_nodes, n_pad)      # bf16, padded

    fwd = jax.jit(gcn_layer_forward)
    out = jax.block_until_ready(fwd(a_pad, x, params))

    # Reference uses the same (dequantized) adjacency; remaining error is
    # MXU bf16 operand rounding only.
    a_f32 = a_pad[:num_nodes, :num_nodes].astype(jnp.float32)
    ref = reference_forward(a_f32, x, params)

    assert out.shape == (num_nodes, DIM_NODE)
    max_err = float(jnp.max(jnp.abs(out - ref)))
    assert jnp.allclose(out, ref, atol=5e-2, rtol=5e-2), f"mismatch vs reference ({max_err})"

    print("KERNEL_OK")
</pallas_src>

<mosaic_0001>
module attributes {stable_mosaic.version = 11 : i64} {
  func.func @spmm_bias_kernel(%arg0: i32, %arg1: i32, %arg2: memref<256x256xbf16, #tpu.memory_space<vmem>>, %arg3: memref<256x128xbf16, #tpu.memory_space<vmem>>, %arg4: memref<1x128xf32, #tpu.memory_space<vmem>>, %arg5: memref<256x128xf32, #tpu.memory_space<vmem>>) attributes {dimension_semantics = [#tpu.dimension_semantics<parallel>, #tpu.dimension_semantics<arbitrary>], iteration_bounds = array<i64: 1, 1>, scalar_prefetch = 0 : i64, scratch_operands = 0 : i64, tpu.core_type = #tpu.core_type<tc>, window_params = [{transform_indices = @transform_0, window_bounds = array<i64: 256, 256>}, {transform_indices = @transform_1, window_bounds = array<i64: 256, 128>}, {pipeline_mode = #tpu.pipeline_mode<synchronous>, transform_indices = @transform_2, window_bounds = array<i64: 1, 128>}, {transform_indices = @transform_3, window_bounds = array<i64: 256, 128>}]} {
    %c0_i32 = arith.constant 0 : i32
    %0 = arith.cmpi eq, %arg1, %c0_i32 : i32
    %1 = arith.extui %0 : i1 to i32
    %c0_i32_0 = arith.constant 0 : i32
    %2 = arith.cmpi ne, %1, %c0_i32_0 : i32
    scf.if %2 {
      %cst_10 = arith.constant 0.000000e+00 : f32
      %12 = vector.broadcast %cst_10 : f32 to vector<256x128xf32>
      %c0_11 = arith.constant 0 : index
      %c0_12 = arith.constant 0 : index
      %13 = vector.load %arg5[%c0_11, %c0_12] : memref<256x128xf32, #tpu.memory_space<vmem>>, vector<256x128xf32>
      tpu.vector_store %arg5[%c0_11, %c0_12], %12 {strides = array<i32>} : memref<256x128xf32, #tpu.memory_space<vmem>>, vector<256x128xf32>,
    } else {
    }
    %c0 = arith.constant 0 : index
    %c0_1 = arith.constant 0 : index
    %3 = vector.load %arg5[%c0, %c0_1] : memref<256x128xf32, #tpu.memory_space<vmem>>, vector<256x128xf32>
    %c0_2 = arith.constant 0 : index
    %c0_3 = arith.constant 0 : index
    %4 = vector.load %arg2[%c0_2, %c0_3] : memref<256x256xbf16, #tpu.memory_space<vmem>>, vector<256x256xbf16>
    %c0_4 = arith.constant 0 : index
    %c0_5 = arith.constant 0 : index
    %5 = vector.load %arg3[%c0_4, %c0_5] : memref<256x128xbf16, #tpu.memory_space<vmem>>, vector<256x128xbf16>
    %cst = arith.constant dense<0.000000e+00> : vector<256x128xf32>
    %6 = tpu.matmul %4, %5, %cst {dimension_numbers = #tpu.dot_dimension_numbers<[1], [0], [0], [1], [0, 0, 1, 1], [], []>} : vector<256x256xbf16>, vector<256x128xbf16>, vector<256x128xf32> -> vector<256x128xf32>
    %7 = arith.addf %3, %6 : vector<256x128xf32>
    %c0_6 = arith.constant 0 : index
    %c0_7 = arith.constant 0 : index
    %8 = vector.load %arg5[%c0_6, %c0_7] : memref<256x128xf32, #tpu.memory_space<vmem>>, vector<256x128xf32>
    tpu.vector_store %arg5[%c0_6, %c0_7], %7 {strides = array<i32>} : memref<256x128xf32, #tpu.memory_space<vmem>>, vector<256x128xf32>,
    %c0_i32_8 = arith.constant 0 : i32
    %9 = arith.cmpi eq, %arg1, %c0_i32_8 : i32
    %10 = arith.extui %9 : i1 to i32
    %c0_i32_9 = arith.constant 0 : i32
    %11 = arith.cmpi ne, %10, %c0_i32_9 : i32
    scf.if %11 {
      %c0_10 = arith.constant 0 : index
      %c0_11 = arith.constant 0 : index
      %12 = vector.load %arg5[%c0_10, %c0_11] : memref<256x128xf32, #tpu.memory_space<vmem>>, vector<256x128xf32>
      %c0_12 = arith.constant 0 : index
      %c0_13 = arith.constant 0 : index
      %13 = vector.load %arg4[%c0_12, %c0_13] : memref<1x128xf32, #tpu.memory_space<vmem>>, vector<1x128xf32>
      %14 = vector.broadcast %13 : vector<1x128xf32> to vector<256x128xf32>
      %15 = arith.addf %12, %14 : vector<256x128xf32>
      %c0_14 = arith.constant 0 : index
      %c0_15 = arith.constant 0 : index
      %16 = vector.load %arg5[%c0_14, %c0_15] : memref<256x128xf32, #tpu.memory_space<vmem>>, vector<256x128xf32>
      tpu.vector_store %arg5[%c0_14, %c0_15], %15 {strides = array<i32>} : memref<256x128xf32, #tpu.memory_space<vmem>>, vector<256x128xf32>,
    } else {
    }
    return
  }
  func.func @transform_0(%arg0: i32, %arg1: i32) -> (i32, i32) {
    %c0_i32 = arith.constant 0 : i32
    return %arg0, %arg1 : i32, i32
  }
  func.func @transform_1(%arg0: i32, %arg1: i32) -> (i32, i32) {
    %c0_i32 = arith.constant 0 : i32
    %c0_i32_0 = arith.constant 0 : i32
    return %arg1, %c0_i32 : i32, i32
  }
  func.func @transform_2(%arg0: i32, %arg1: i32) -> (i32, i32) {
    %c0_i32 = arith.constant 0 : i32
    %c0_i32_0 = arith.constant 0 : i32
    %c0_i32_1 = arith.constant 0 : i32
    return %c0_i32, %c0_i32_0 : i32, i32
  }
  func.func @transform_3(%arg0: i32, %arg1: i32) -> (i32, i32) {
    %c0_i32 = arith.constant 0 : i32
    %c0_i32_0 = arith.constant 0 : i32
    return %arg0, %c0_i32 : i32, i32
  }
}

</mosaic_0001>

<llo_original>
// kernel: gcn_layer_forward.2
$region0: #{gcn_layer_forward.2}
  #allocation0 [shape = 'u32[]', space=smem, size = 0x4, offset = 0x4, fixed_abs, tag = 'smem constant byte address 0x4 - core index']
  #allocation1 [shape = 'u32[72,128]{1,0:T(1,128)}', space=vmem, size = 0x9000, scoped, tag = 'internal scratch']
  %s0 = inlined_call_operand.vmem [shape: bf16[256,256], index: 0, kind: input, shape index: {}]
  %s1 = inlined_call_operand.vmem [shape: bf16[256,128], index: 1, kind: input, shape index: {}]
  %s2 = inlined_call_operand.vmem [shape: f32[1,128], index: 2, kind: input, shape index: {}]
  %s3 = inlined_call_operand.vmem [shape: f32[256,128], index: 3, kind: output, shape index: {}]
  %s4 = sld [smem:[#allocation0]]
  $region30: #{gcn_layer_forward.2} parent=0
    _
  %s6 = ssub.s32 1, %s4
  %s7 = scalar_select 0, %s6, %s4
  // Predicated region
  $region2: #{gcn_layer_forward.2} parent=0 // pred_check
    _
  $region3: #{gcn_layer_forward.2} parent=0 // pred_check_branch
    %9 = sbr.rel (0) target = $region5
  $region4: #{gcn_layer_forward.2} parent=0 // pred_region
    _
  $region5: #{gcn_layer_forward.2} parent=0 // pred_fallthru
    _
  // Predicated region
  $region6: #{gcn_layer_forward.2} parent=0 // pred_check
    _
  $region7: #{gcn_layer_forward.2} parent=0 // pred_check_branch
    %11 = sbr.rel (0) target = $region9
  $region8: #{gcn_layer_forward.2} parent=0 // pred_region
    _
  $region9: #{gcn_layer_forward.2} parent=0 // pred_fallthru
    _
  // Predicated region
  $region10: #{gcn_layer_forward.2} parent=0 // pred_check
    _
  $region11: #{gcn_layer_forward.2} parent=0 // pred_check_branch
    %13 = sbr.rel (0) target = $region13
  $region12: #{gcn_layer_forward.2} parent=0 // pred_region
    _
  $region13: #{gcn_layer_forward.2} parent=0 // pred_fallthru
    _
  %p14 = scmp.eq.s32.totalorder 0, 0
  // Predicated region
  $region14: #{gcn_layer_forward.2} parent=0 // pred_check
    %p15 = pneg %p14
  $region15: #{gcn_layer_forward.2} parent=0 // pred_check_branch
    %17 = sbr.rel (%p15) target = $region17
  $region16: #{gcn_layer_forward.2} parent=0 // pred_region
    %18 = vst [vmem:[%s3] sm:$0xff] 0.0
    %19 = vst [vmem:[%s3 + $0x8] sm:$0xff] 0.0
    %20 = vst [vmem:[%s3 + $0x10] sm:$0xff] 0.0
    %21 = vst [vmem:[%s3 + $0x18] sm:$0xff] 0.0
    %22 = vst [vmem:[%s3 + $0x20] sm:$0xff] 0.0
    %23 = vst [vmem:[%s3 + $0x28] sm:$0xff] 0.0
    %24 = vst [vmem:[%s3 + $0x30] sm:$0xff] 0.0
    %25 = vst [vmem:[%s3 + $0x38] sm:$0xff] 0.0
    %26 = vst [vmem:[%s3 + $0x40] sm:$0xff] 0.0
    %27 = vst [vmem:[%s3 + $0x48] sm:$0xff] 0.0
    %28 = vst [vmem:[%s3 + $0x50] sm:$0xff] 0.0
    %29 = vst [vmem:[%s3 + $0x58] sm:$0xff] 0.0
    %30 = vst [vmem:[%s3 + $0x60] sm:$0xff] 0.0
    %31 = vst [vmem:[%s3 + $0x68] sm:$0xff] 0.0
    %32 = vst [vmem:[%s3 + $0x70] sm:$0xff] 0.0
    %33 = vst [vmem:[%s3 + $0x78] sm:$0xff] 0.0
    %34 = vst [vmem:[%s3 + $0x80] sm:$0xff] 0.0
    %35 = vst [vmem:[%s3 + $0x88] sm:$0xff] 0.0
    %36 = vst [vmem:[%s3 + $0x90] sm:$0xff] 0.0
    %37 = vst [vmem:[%s3 + $0x98] sm:$0xff] 0.0
    %38 = vst [vmem:[%s3 + $0xa0] sm:$0xff] 0.0
    %39 = vst [vmem:[%s3 + $0xa8] sm:$0xff] 0.0
    %40 = vst [vmem:[%s3 + $0xb0] sm:$0xff] 0.0
    %41 = vst [vmem:[%s3 + $0xb8] sm:$0xff] 0.0
    %42 = vst [vmem:[%s3 + $0xc0] sm:$0xff] 0.0
    %43 = vst [vmem:[%s3 + $0xc8] sm:$0xff] 0.0
    %44 = vst [vmem:[%s3 + $0xd0] sm:$0xff] 0.0
    %45 = vst [vmem:[%s3 + $0xd8] sm:$0xff] 0.0
    %46 = vst [vmem:[%s3 + $0xe0] sm:$0xff] 0.0
    %47 = vst [vmem:[%s3 + $0xe8] sm:$0xff] 0.0
    %48 = vst [vmem:[%s3 + $0xf0] sm:$0xff] 0.0
    %49 = vst [vmem:[%s3 + $0xf8] sm:$0xff] 0.0
  $region17: #{gcn_layer_forward.2} parent=0 // pred_fallthru
    _
  %v50 = vld [vmem:[%s3] sm:$0xff]
  %v51 = vld [vmem:[%s3 + $0x8] sm:$0xff]
  %v52 = vld [vmem:[%s3 + $0x10] sm:$0xff]
  %v53 = vld [vmem:[%s3 + $0x18] sm:$0xff]
  %v54 = vld [vmem:[%s3 + $0x20] sm:$0xff]
  %v55 = vld [vmem:[%s3 + $0x28] sm:$0xff]
  %v56 = vld [vmem:[%s3 + $0x30] sm:$0xff]
  %v57 = vld [vmem:[%s3 + $0x38] sm:$0xff]
  %v58 = vld [vmem:[%s3 + $0x40] sm:$0xff]
  %v59 = vld [vmem:[%s3 + $0x48] sm:$0xff]
  %v60 = vld [vmem:[%s3 + $0x50] sm:$0xff]
  %v61 = vld [vmem:[%s3 + $0x58] sm:$0xff]
  %v62 = vld [vmem:[%s3 + $0x60] sm:$0xff]
  %v63 = vld [vmem:[%s3 + $0x68] sm:$0xff]
  %v64 = vld [vmem:[%s3 + $0x70] sm:$0xff]
  %v65 = vld [vmem:[%s3 + $0x78] sm:$0xff]
  %v66 = vld [vmem:[%s3 + $0x80] sm:$0xff]
  %v67 = vld [vmem:[%s3 + $0x88] sm:$0xff]
  %v68 = vld [vmem:[%s3 + $0x90] sm:$0xff]
  %v69 = vld [vmem:[%s3 + $0x98] sm:$0xff]
  %v70 = vld [vmem:[%s3 + $0xa0] sm:$0xff]
  %v71 = vld [vmem:[%s3 + $0xa8] sm:$0xff]
  %v72 = vld [vmem:[%s3 + $0xb0] sm:$0xff]
  %v73 = vld [vmem:[%s3 + $0xb8] sm:$0xff]
  %v74 = vld [vmem:[%s3 + $0xc0] sm:$0xff]
  %v75 = vld [vmem:[%s3 + $0xc8] sm:$0xff]
  %v76 = vld [vmem:[%s3 + $0xd0] sm:$0xff]
  %v77 = vld [vmem:[%s3 + $0xd8] sm:$0xff]
  %v78 = vld [vmem:[%s3 + $0xe0] sm:$0xff]
  %v79 = vld [vmem:[%s3 + $0xe8] sm:$0xff]
  %v80 = vld [vmem:[%s3 + $0xf0] sm:$0xff]
  %v81 = vld [vmem:[%s3 + $0xf8] sm:$0xff]
  %v82 = vld [vmem:[%s0] sm:$0xff]
  %v83 = vld [vmem:[%s0 + $0x8] sm:$0xff]
  %v84 = vld [vmem:[%s0 + $0x10] sm:$0xff]
  %v85 = vld [vmem:[%s0 + $0x18] sm:$0xff]
  %v86 = vld [vmem:[%s0 + $0x20] sm:$0xff]
  %v87 = vld [vmem:[%s0 + $0x28] sm:$0xff]
  %v88 = vld [vmem:[%s0 + $0x30] sm:$0xff]
  %v89 = vld [vmem:[%s0 + $0x38] sm:$0xff]
  %v90 = vld [vmem:[%s0 + $0x40] sm:$0xff]
  %v91 = vld [vmem:[%s0 + $0x48] sm:$0xff]
  %v92 = vld [vmem:[%s0 + $0x50] sm:$0xff]
  %v93 = vld [vmem:[%s0 + $0x58] sm:$0xff]
  %v94 = vld [vmem:[%s0 + $0x60] sm:$0xff]
  %v95 = vld [vmem:[%s0 + $0x68] sm:$0xff]
  %v96 = vld [vmem:[%s0 + $0x70] sm:$0xff]
  %v97 = vld [vmem:[%s0 + $0x78] sm:$0xff]
  %v98 = vld [vmem:[%s0 + $0x80] sm:$0xff]
  %v99 = vld [vmem:[%s0 + $0x88] sm:$0xff]
  %v100 = vld [vmem:[%s0 + $0x90] sm:$0xff]
  %v101 = vld [vmem:[%s0 + $0x98] sm:$0xff]
  %v102 = vld [vmem:[%s0 + $0xa0] sm:$0xff]
  %v103 = vld [vmem:[%s0 + $0xa8] sm:$0xff]
  %v104 = vld [vmem:[%s0 + $0xb0] sm:$0xff]
  %v105 = vld [vmem:[%s0 + $0xb8] sm:$0xff]
  %v106 = vld [vmem:[%s0 + $0xc0] sm:$0xff]
  %v107 = vld [vmem:[%s0 + $0xc8] sm:$0xff]
  %v108 = vld [vmem:[%s0 + $0xd0] sm:$0xff]
  %v109 = vld [vmem:[%s0 + $0xd8] sm:$0xff]
  %v110 = vld [vmem:[%s0 + $0xe0] sm:$0xff]
  %v111 = vld [vmem:[%s0 + $0xe8] sm:$0xff]
  %v112 = vld [vmem:[%s0 + $0xf0] sm:$0xff]
  %v113 = vld [vmem:[%s0 + $0xf8] sm:$0xff]
  %v114 = vld [vmem:[%s1] sm:$0xf]
  %v115 = vld [vmem:[%s1 + $0x4] sm:$0xf]
  %v116 = vld [vmem:[%s1 + $0x8] sm:$0xf]
  %v117 = vld [vmem:[%s1 + $0xc] sm:$0xf]
  %v118 = vld [vmem:[%s1 + $0x10] sm:$0xf]
  %v119 = vld [vmem:[%s1 + $0x14] sm:$0xf]
  %v120 = vld [vmem:[%s1 + $0x18] sm:$0xf]
  %v121 = vld [vmem:[%s1 + $0x1c] sm:$0xf]
  %v122 = vld [vmem:[%s1 + $0x20] sm:$0xf]
  %v123 = vld [vmem:[%s1 + $0x24] sm:$0xf]
  %v124 = vld [vmem:[%s1 + $0x28] sm:$0xf]
  %v125 = vld [vmem:[%s1 + $0x2c] sm:$0xf]
  %v126 = vld [vmem:[%s1 + $0x30] sm:$0xf]
  %v127 = vld [vmem:[%s1 + $0x34] sm:$0xf]
  %v128 = vld [vmem:[%s1 + $0x38] sm:$0xf]
  %v129 = vld [vmem:[%s1 + $0x3c] sm:$0xf]
  %v130 = vld [vmem:[%s1 + $0x40] sm:$0xf]
  %v131 = vld [vmem:[%s1 + $0x44] sm:$0xf]
  %v132 = vld [vmem:[%s1 + $0x48] sm:$0xf]
  %v133 = vld [vmem:[%s1 + $0x4c] sm:$0xf]
  %v134 = vld [vmem:[%s1 + $0x50] sm:$0xf]
  %v135 = vld [vmem:[%s1 + $0x54] sm:$0xf]
  %v136 = vld [vmem:[%s1 + $0x58] sm:$0xf]
  %v137 = vld [vmem:[%s1 + $0x5c] sm:$0xf]
  %v138 = vld [vmem:[%s1 + $0x60] sm:$0xf]
  %v139 = vld [vmem:[%s1 + $0x64] sm:$0xf]
  %v140 = vld [vmem:[%s1 + $0x68] sm:$0xf]
  %v141 = vld [vmem:[%s1 + $0x6c] sm:$0xf]
  %v142 = vld [vmem:[%s1 + $0x70] sm:$0xf]
  %v143 = vld [vmem:[%s1 + $0x74] sm:$0xf]
  %v144 = vld [vmem:[%s1 + $0x78] sm:$0xf]
  %v145 = vld [vmem:[%s1 + $0x7c] sm:$0xf]
  %v178 = vunpack.c.l.b16 %v82
  %v179 = vunpack.c.h.b16 %v82
  %v180 = vunpack.c.l.b16 %v83
  %v181 = vunpack.c.h.b16 %v83
  %v182 = vunpack.c.l.b16 %v84
  %v183 = vunpack.c.h.b16 %v84
  %v184 = vunpack.c.l.b16 %v85
  %v185 = vunpack.c.h.b16 %v85
  %v186 = vunpack.c.l.b16 %v86
  %v187 = vunpack.c.h.b16 %v86
  %v188 = vunpack.c.l.b16 %v87
  %v189 = vunpack.c.h.b16 %v87
  %v190 = vunpack.c.l.b16 %v88
  %v191 = vunpack.c.h.b16 %v88
  %v192 = vunpack.c.l.b16 %v89
  %v193 = vunpack.c.h.b16 %v89
  %v194 = vunpack.c.l.b16 %v90
  %v195 = vunpack.c.h.b16 %v90
  %v196 = vunpack.c.l.b16 %v91
  %v197 = vunpack.c.h.b16 %v91
  %v198 = vunpack.c.l.b16 %v92
  %v199 = vunpack.c.h.b16 %v92
  %v200 = vunpack.c.l.b16 %v93
  %v201 = vunpack.c.h.b16 %v93
  %v202 = vunpack.c.l.b16 %v94
  %v203 = vunpack.c.h.b16 %v94
  %v204 = vunpack.c.l.b16 %v95
  %v205 = vunpack.c.h.b16 %v95
  %v206 = vunpack.c.l.b16 %v96
  %v207 = vunpack.c.h.b16 %v96
  %v208 = vunpack.c.l.b16 %v97
  %v209 = vunpack.c.h.b16 %v97
  %v210 = vunpack.c.l.b16 %v98
  %v211 = vunpack.c.h.b16 %v98
  %v212 = vunpack.c.l.b16 %v99
  %v213 = vunpack.c.h.b16 %v99
  %v214 = vunpack.c.l.b16 %v100
  %v215 = vunpack.c.h.b16 %v100
  %v216 = vunpack.c.l.b16 %v101
  %v217 = vunpack.c.h.b16 %v101
  %v218 = vunpack.c.l.b16 %v102
  %v219 = vunpack.c.h.b16 %v102
  %v220 = vunpack.c.l.b16 %v103
  %v221 = vunpack.c.h.b16 %v103
  %v222 = vunpack.c.l.b16 %v104
  %v223 = vunpack.c.h.b16 %v104
  %v224 = vunpack.c.l.b16 %v105
  %v225 = vunpack.c.h.b16 %v105
  %v226 = vunpack.c.l.b16 %v106
  %v227 = vunpack.c.h.b16 %v106
  %v228 = vunpack.c.l.b16 %v107
  %v229 = vunpack.c.h.b16 %v107
  %v230 = vunpack.c.l.b16 %v108
  %v231 = vunpack.c.h.b16 %v108
  %v232 = vunpack.c.l.b16 %v109
  %v233 = vunpack.c.h.b16 %v109
  %v234 = vunpack.c.l.b16 %v110
  %v235 = vunpack.c.h.b16 %v110
  %v236 = vunpack.c.l.b16 %v111
  %v237 = vunpack.c.h.b16 %v111
  %v238 = vunpack.c.l.b16 %v112
  %v239 = vunpack.c.h.b16 %v112
  %v240 = vunpack.c.l.b16 %v113
  %v241 = vunpack.c.h.b16 %v113
  %v242 = vpack.c.b16 %v180, %v178
  %v243 = vpack.c.b16 %v181, %v179
  %v244 = vpack.c.b16 %v184, %v182
  %v245 = vpack.c.b16 %v185, %v183
  %v246 = vpack.c.b16 %v188, %v186
  %v247 = vpack.c.b16 %v189, %v187
  %v248 = vpack.c.b16 %v192, %v190
  %v249 = vpack.c.b16 %v193, %v191
  %v250 = vpack.c.b16 %v196, %v194
  %v251 = vpack.c.b16 %v197, %v195
  %v252 = vpack.c.b16 %v200, %v198
  %v253 = vpack.c.b16 %v201, %v199
  %v254 = vpack.c.b16 %v204, %v202
  %v255 = vpack.c.b16 %v205, %v203
  %v256 = vpack.c.b16 %v208, %v206
  %v257 = vpack.c.b16 %v209, %v207
  %v258 = vpack.c.b16 %v212, %v210
  %v259 = vpack.c.b16 %v213, %v211
  %v260 = vpack.c.b16 %v216, %v214
  %v261 = vpack.c.b16 %v217, %v215
  %v262 = vpack.c.b16 %v220, %v218
  %v263 = vpack.c.b16 %v221, %v219
  %v264 = vpack.c.b16 %v224, %v222
  %v265 = vpack.c.b16 %v225, %v223
  %v266 = vpack.c.b16 %v228, %v226
  %v267 = vpack.c.b16 %v229, %v227
  %v268 = vpack.c.b16 %v232, %v230
  %v269 = vpack.c.b16 %v233, %v231
  %v270 = vpack.c.b16 %v236, %v234
  %v271 = vpack.c.b16 %v237, %v235
  %v272 = vpack.c.b16 %v240, %v238
  %v273 = vpack.c.b16 %v241, %v239
  %v338 = vunpack.c.l.b16 %v114
  %v339 = vunpack.c.l.b16 %v115
  %v340 = vunpack.c.l.b16 %v116
  %v341 = vunpack.c.l.b16 %v117
  %v342 = vunpack.c.l.b16 %v118
  %v343 = vunpack.c.l.b16 %v119
  %v344 = vunpack.c.l.b16 %v120
  %v345 = vunpack.c.l.b16 %v121
  %v346 = vunpack.c.l.b16 %v122
  %v347 = vunpack.c.l.b16 %v123
  %v348 = vunpack.c.l.b16 %v124
  %v349 = vunpack.c.l.b16 %v125
  %v350 = vunpack.c.l.b16 %v126
  %v351 = vunpack.c.l.b16 %v127
  %v352 = vunpack.c.l.b16 %v128
  %v353 = vunpack.c.l.b16 %v129
  %v354 = vunpack.c.l.b16 %v130
  %v355 = vunpack.c.l.b16 %v131
  %v356 = vunpack.c.l.b16 %v132
  %v357 = vunpack.c.l.b16 %v133
  %v358 = vunpack.c.l.b16 %v134
  %v359 = vunpack.c.l.b16 %v135
  %v360 = vunpack.c.l.b16 %v136
  %v361 = vunpack.c.l.b16 %v137
  %v362 = vunpack.c.l.b16 %v138
  %v363 = vunpack.c.l.b16 %v139
  %v364 = vunpack.c.l.b16 %v140
  %v365 = vunpack.c.l.b16 %v141
  %v366 = vunpack.c.l.b16 %v142
  %v367 = vunpack.c.l.b16 %v143
  %v368 = vunpack.c.l.b16 %v144
  %v369 = vunpack.c.l.b16 %v145
  %v370 = vpack.c.b16 %v339, %v338
  %v371 = vpack.c.b16 %v341, %v340
  %v372 = vpack.c.b16 %v343, %v342
  %v373 = vpack.c.b16 %v345, %v344
  %v374 = vpack.c.b16 %v347, %v346
  %v375 = vpack.c.b16 %v349, %v348
  %v376 = vpack.c.b16 %v351, %v350
  %v377 = vpack.c.b16 %v353, %v352
  %v378 = vpack.c.b16 %v355, %v354
  %v379 = vpack.c.b16 %v357, %v356
  %v380 = vpack.c.b16 %v359, %v358
  %v381 = vpack.c.b16 %v361, %v360
  %v382 = vpack.c.b16 %v363, %v362
  %v383 = vpack.c.b16 %v365, %v364
  %v384 = vpack.c.b16 %v367, %v366
  %v385 = vpack.c.b16 %v369, %v368
  %402 = vmatpush.bf16.msra.mxu0 %v377
  %403 = vmatpush.bf16.msra.mxu0 %v376
  %404 = vmatpush.bf16.msra.mxu0 %v375
  %405 = vmatpush.bf16.msra.mxu0 %v374
  %406 = vmatpush.bf16.msra.mxu0 %v373
  %407 = vmatpush.bf16.msra.mxu0 %v372
  %408 = vmatpush.bf16.msra.mxu0 %v371
  %409 = vmatpush.bf16.msra.mxu0 %v370
  %410 = vmatmul.bf16.gmra.mxu0 %v242
  %v411 = vpop.f32.mrf.mxu0
  %v412 = vadd.f32 0.0, %v411
  %v413 = vpop.f32.mrf.mxu0
  %v414 = vadd.f32 0.0, %v413
  %415 = vmatmul.bf16.gmra.mxu0 %v244
  %v416 = vpop.f32.mrf.mxu0
  %v417 = vadd.f32 0.0, %v416
  %v418 = vpop.f32.mrf.mxu0
  %v419 = vadd.f32 0.0, %v418
  %420 = vmatmul.bf16.gmra.mxu0 %v246
  %v421 = vpop.f32.mrf.mxu0
  %v422 = vadd.f32 0.0, %v421
  %v423 = vpop.f32.mrf.mxu0
  %v424 = vadd.f32 0.0, %v423
  %425 = vmatmul.bf16.gmra.mxu0 %v248
  %v426 = vpop.f32.mrf.mxu0
  %v427 = vadd.f32 0.0, %v426
  %v428 = vpop.f32.mrf.mxu0
  %v429 = vadd.f32 0.0, %v428
  %430 = vmatmul.bf16.gmra.mxu0 %v250
  %v431 = vpop.f32.mrf.mxu0
  %v432 = vadd.f32 0.0, %v431
  %v433 = vpop.f32.mrf.mxu0
  %v434 = vadd.f32 0.0, %v433
  %435 = vmatmul.bf16.gmra.mxu0 %v252
  %v436 = vpop.f32.mrf.mxu0
  %v437 = vadd.f32 0.0, %v436
  %v438 = vpop.f32.mrf.mxu0
  %v439 = vadd.f32 0.0, %v438
  %440 = vmatmul.bf16.gmra.mxu0 %v254
  %v441 = vpop.f32.mrf.mxu0
  %v442 = vadd.f32 0.0, %v441
  %v443 = vpop.f32.mrf.mxu0
  %v444 = vadd.f32 0.0, %v443
  %445 = vmatmul.bf16.gmra.mxu0 %v256
  %v446 = vpop.f32.mrf.mxu0
  %v447 = vadd.f32 0.0, %v446
  %v448 = vpop.f32.mrf.mxu0
  %v449 = vadd.f32 0.0, %v448
  %450 = vmatmul.bf16.gmra.mxu0 %v258
  %v451 = vpop.f32.mrf.mxu0
  %v452 = vadd.f32 0.0, %v451
  %v453 = vpop.f32.mrf.mxu0
  %v454 = vadd.f32 0.0, %v453
  %455 = vmatmul.bf16.gmra.mxu0 %v260
  %v456 = vpop.f32.mrf.mxu0
  %v457 = vadd.f32 0.0, %v456
  %v458 = vpop.f32.mrf.mxu0
  %v459 = vadd.f32 0.0, %v458
  %460 = vmatmul.bf16.gmra.mxu0 %v262
  %v461 = vpop.f32.mrf.mxu0
  %v462 = vadd.f32 0.0, %v461
  %v463 = vpop.f32.mrf.mxu0
  %v464 = vadd.f32 0.0, %v463
  %465 = vmatmul.bf16.gmra.mxu0 %v264
  %v466 = vpop.f32.mrf.mxu0
  %v467 = vadd.f32 0.0, %v466
  %v468 = vpop.f32.mrf.mxu0
  %v469 = vadd.f32 0.0, %v468
  %470 = vmatmul.bf16.gmra.mxu0 %v266
  %v471 = vpop.f32.mrf.mxu0
  %v472 = vadd.f32 0.0, %v471
  %v473 = vpop.f32.mrf.mxu0
  %v474 = vadd.f32 0.0, %v473
  %475 = vmatmul.bf16.gmra.mxu0 %v268
  %v476 = vpop.f32.mrf.mxu0
  %v477 = vadd.f32 0.0, %v476
  %v478 = vpop.f32.mrf.mxu0
  %v479 = vadd.f32 0.0, %v478
  %480 = vmatmul.bf16.gmra.mxu0 %v270
  %v481 = vpop.f32.mrf.mxu0
  %v482 = vadd.f32 0.0, %v481
  %v483 = vpop.f32.mrf.mxu0
  %v484 = vadd.f32 0.0, %v483
  %485 = vmatmul.bf16.gmra.mxu0 %v272
  %v486 = vpop.f32.mrf.mxu0
  %v487 = vadd.f32 0.0, %v486
  %v488 = vpop.f32.mrf.mxu0
  %v489 = vadd.f32 0.0, %v488
  %490 = vdwg.mxu0
  %491 = vmatpush.bf16.msra.mxu0 %v385
  %492 = vmatpush.bf16.msra.mxu0 %v384
  %493 = vmatpush.bf16.msra.mxu0 %v383
  %494 = vmatpush.bf16.msra.mxu0 %v382
  %495 = vmatpush.bf16.msra.mxu0 %v381
  %496 = vmatpush.bf16.msra.mxu0 %v380
  %497 = vmatpush.bf16.msra.mxu0 %v379
  %498 = vmatpush.bf16.msra.mxu0 %v378
  %499 = vmatmul.bf16.gmra.mxu0 %v243
  %v500 = vpop.f32.mrf.mxu0
  %v501 = vadd.f32 %v412, %v500
  %v502 = vpop.f32.mrf.mxu0
  %v503 = vadd.f32 %v414, %v502
  %504 = vmatmul.bf16.gmra.mxu0 %v245
  %v505 = vpop.f32.mrf.mxu0
  %v506 = vadd.f32 %v417, %v505
  %v507 = vpop.f32.mrf.mxu0
  %v508 = vadd.f32 %v419, %v507
  %509 = vmatmul.bf16.gmra.mxu0 %v247
  %v510 = vpop.f32.mrf.mxu0
  %v511 = vadd.f32 %v422, %v510
  %v512 = vpop.f32.mrf.mxu0
  %v513 = vadd.f32 %v424, %v512
  %514 = vmatmul.bf16.gmra.mxu0 %v249
  %v515 = vpop.f32.mrf.mxu0
  %v516 = vadd.f32 %v427, %v515
  %v517 = vpop.f32.mrf.mxu0
  %v518 = vadd.f32 %v429, %v517
  %519 = vmatmul.bf16.gmra.mxu0 %v251
  %v520 = vpop.f32.mrf.mxu0
  %v521 = vadd.f32 %v432, %v520
  %v522 = vpop.f32.mrf.mxu0
  %v523 = vadd.f32 %v434, %v522
  %524 = vmatmul.bf16.gmra.mxu0 %v253
  %v525 = vpop.f32.mrf.mxu0
  %v526 = vadd.f32 %v437, %v525
  %v527 = vpop.f32.mrf.mxu0
  %v528 = vadd.f32 %v439, %v527
  %529 = vmatmul.bf16.gmra.mxu0 %v255
  %v530 = vpop.f32.mrf.mxu0
  %v531 = vadd.f32 %v442, %v530
  %v532 = vpop.f32.mrf.mxu0
  %v533 = vadd.f32 %v444, %v532
  %534 = vmatmul.bf16.gmra.mxu0 %v257
  %v535 = vpop.f32.mrf.mxu0
  %v536 = vadd.f32 %v447, %v535
  %v537 = vpop.f32.mrf.mxu0
  %v538 = vadd.f32 %v449, %v537
  %539 = vmatmul.bf16.gmra.mxu0 %v259
  %v540 = vpop.f32.mrf.mxu0
  %v541 = vadd.f32 %v452, %v540
  %v542 = vpop.f32.mrf.mxu0
  %v543 = vadd.f32 %v454, %v542
  %544 = vmatmul.bf16.gmra.mxu0 %v261
  %v545 = vpop.f32.mrf.mxu0
  %v546 = vadd.f32 %v457, %v545
  %v547 = vpop.f32.mrf.mxu0
  %v548 = vadd.f32 %v459, %v547
  %549 = vmatmul.bf16.gmra.mxu0 %v263
  %v550 = vpop.f32.mrf.mxu0
  %v551 = vadd.f32 %v462, %v550
  %v552 = vpop.f32.mrf.mxu0
  %v553 = vadd.f32 %v464, %v552
  %554 = vmatmul.bf16.gmra.mxu0 %v265
  %v555 = vpop.f32.mrf.mxu0
  %v556 = vadd.f32 %v467, %v555
  %v557 = vpop.f32.mrf.mxu0
  %v558 = vadd.f32 %v469, %v557
  %559 = vmatmul.bf16.gmra.mxu0 %v267
  %v560 = vpop.f32.mrf.mxu0
  %v561 = vadd.f32 %v472, %v560
  %v562 = vpop.f32.mrf.mxu0
  %v563 = vadd.f32 %v474, %v562
  %564 = vmatmul.bf16.gmra.mxu0 %v269
  %v565 = vpop.f32.mrf.mxu0
  %v566 = vadd.f32 %v477, %v565
  %v567 = vpop.f32.mrf.mxu0
  %v568 = vadd.f32 %v479, %v567
  %569 = vmatmul.bf16.gmra.mxu0 %v271
  %v570 = vpop.f32.mrf.mxu0
  %v571 = vadd.f32 %v482, %v570
  %v572 = vpop.f32.mrf.mxu0
  %v573 = vadd.f32 %v484, %v572
  %574 = vmatmul.bf16.gmra.mxu0 %v273
  %v575 = vpop.f32.mrf.mxu0
  %v576 = vadd.f32 %v487, %v575
  %v577 = vpop.f32.mrf.mxu0
  %v578 = vadd.f32 %v489, %v577
  %579 = vdwg.mxu0
  %v580 = vadd.f32 %v50, %v501
  %v581 = vadd.f32 %v51, %v503
  %v582 = vadd.f32 %v52, %v506
  %v583 = vadd.f32 %v53, %v508
  %v584 = vadd.f32 %v54, %v511
  %v585 = vadd.f32 %v55, %v513
  %v586 = vadd.f32 %v56, %v516
  %v587 = vadd.f32 %v57, %v518
  %v588 = vadd.f32 %v58, %v521
  %v589 = vadd.f32 %v59, %v523
  %v590 = vadd.f32 %v60, %v526
  %v591 = vadd.f32 %v61, %v528
  %v592 = vadd.f32 %v62, %v531
  %v593 = vadd.f32 %v63, %v533
  %v594 = vadd.f32 %v64, %v536
  %v595 = vadd.f32 %v65, %v538
  %v596 = vadd.f32 %v66, %v541
  %v597 = vadd.f32 %v67, %v543
  %v598 = vadd.f32 %v68, %v546
  %v599 = vadd.f32 %v69, %v548
  %v600 = vadd.f32 %v70, %v551
  %v601 = vadd.f32 %v71, %v553
  %v602 = vadd.f32 %v72, %v556
  %v603 = vadd.f32 %v73, %v558
  %v604 = vadd.f32 %v74, %v561
  %v605 = vadd.f32 %v75, %v563
  %v606 = vadd.f32 %v76, %v566
  %v607 = vadd.f32 %v77, %v568
  %v608 = vadd.f32 %v78, %v571
  %v609 = vadd.f32 %v79, %v573
  %v610 = vadd.f32 %v80, %v576
  %v611 = vadd.f32 %v81, %v578
  %612 = vst [vmem:[%s3] sm:$0xff] %v580
  %613 = vst [vmem:[%s3 + $0x8] sm:$0xff] %v581
  %614 = vst [vmem:[%s3 + $0x10] sm:$0xff] %v582
  %615 = vst [vmem:[%s3 + $0x18] sm:$0xff] %v583
  %616 = vst [vmem:[%s3 + $0x20] sm:$0xff] %v584
  %617 = vst [vmem:[%s3 + $0x28] sm:$0xff] %v585
  %618 = vst [vmem:[%s3 + $0x30] sm:$0xff] %v586
  %619 = vst [vmem:[%s3 + $0x38] sm:$0xff] %v587
  %620 = vst [vmem:[%s3 + $0x40] sm:$0xff] %v588
  %621 = vst [vmem:[%s3 + $0x48] sm:$0xff] %v589
  %622 = vst [vmem:[%s3 + $0x50] sm:$0xff] %v590
  %623 = vst [vmem:[%s3 + $0x58] sm:$0xff] %v591
  %624 = vst [vmem:[%s3 + $0x60] sm:$0xff] %v592
  %625 = vst [vmem:[%s3 + $0x68] sm:$0xff] %v593
  %626 = vst [vmem:[%s3 + $0x70] sm:$0xff] %v594
  %627 = vst [vmem:[%s3 + $0x78] sm:$0xff] %v595
  %628 = vst [vmem:[%s3 + $0x80] sm:$0xff] %v596
  %629 = vst [vmem:[%s3 + $0x88] sm:$0xff] %v597
  %630 = vst [vmem:[%s3 + $0x90] sm:$0xff] %v598
  %631 = vst [vmem:[%s3 + $0x98] sm:$0xff] %v599
  %632 = vst [vmem:[%s3 + $0xa0] sm:$0xff] %v600
  %633 = vst [vmem:[%s3 + $0xa8] sm:$0xff] %v601
  %634 = vst [vmem:[%s3 + $0xb0] sm:$0xff] %v602
  %635 = vst [vmem:[%s3 + $0xb8] sm:$0xff] %v603
  %636 = vst [vmem:[%s3 + $0xc0] sm:$0xff] %v604
  %637 = vst [vmem:[%s3 + $0xc8] sm:$0xff] %v605
  %638 = vst [vmem:[%s3 + $0xd0] sm:$0xff] %v606
  %639 = vst [vmem:[%s3 + $0xd8] sm:$0xff] %v607
  %640 = vst [vmem:[%s3 + $0xe0] sm:$0xff] %v608
  %641 = vst [vmem:[%s3 + $0xe8] sm:$0xff] %v609
  %642 = vst [vmem:[%s3 + $0xf0] sm:$0xff] %v610
  %643 = vst [vmem:[%s3 + $0xf8] sm:$0xff] %v611
  // Predicated region
  $region18: #{gcn_layer_forward.2} parent=0 // pred_check
    %p644 = pneg %p14
  $region19: #{gcn_layer_forward.2} parent=0 // pred_check_branch
    %646 = sbr.rel (%p644) target = $region21
  $region20: #{gcn_layer_forward.2} parent=0 // pred_region
    %v647 = vld [vmem:[%s3] sm:$0xff]
    %v648 = vld [vmem:[%s3 + $0x8] sm:$0xff]
    %v649 = vld [vmem:[%s3 + $0x10] sm:$0xff]
    %v650 = vld [vmem:[%s3 + $0x18] sm:$0xff]
    %v651 = vld [vmem:[%s3 + $0x20] sm:$0xff]
    %v652 = vld [vmem:[%s3 + $0x28] sm:$0xff]
    %v653 = vld [vmem:[%s3 + $0x30] sm:$0xff]
    %v654 = vld [vmem:[%s3 + $0x38] sm:$0xff]
    %v655 = vld [vmem:[%s3 + $0x40] sm:$0xff]
    %v656 = vld [vmem:[%s3 + $0x48] sm:$0xff]
    %v657 = vld [vmem:[%s3 + $0x50] sm:$0xff]
    %v658 = vld [vmem:[%s3 + $0x58] sm:$0xff]
    %v659 = vld [vmem:[%s3 + $0x60] sm:$0xff]
    %v660 = vld [vmem:[%s3 + $0x68] sm:$0xff]
    %v661 = vld [vmem:[%s3 + $0x70] sm:$0xff]
    %v662 = vld [vmem:[%s3 + $0x78] sm:$0xff]
    %v663 = vld [vmem:[%s3 + $0x80] sm:$0xff]
    %v664 = vld [vmem:[%s3 + $0x88] sm:$0xff]
    %v665 = vld [vmem:[%s3 + $0x90] sm:$0xff]
    %v666 = vld [vmem:[%s3 + $0x98] sm:$0xff]
    %v667 = vld [vmem:[%s3 + $0xa0] sm:$0xff]
    %v668 = vld [vmem:[%s3 + $0xa8] sm:$0xff]
    %v669 = vld [vmem:[%s3 + $0xb0] sm:$0xff]
    %v670 = vld [vmem:[%s3 + $0xb8] sm:$0xff]
    %v671 = vld [vmem:[%s3 + $0xc0] sm:$0xff]
    %v672 = vld [vmem:[%s3 + $0xc8] sm:$0xff]
    %v673 = vld [vmem:[%s3 + $0xd0] sm:$0xff]
    %v674 = vld [vmem:[%s3 + $0xd8] sm:$0xff]
    %v675 = vld [vmem:[%s3 + $0xe0] sm:$0xff]
    %v676 = vld [vmem:[%s3 + $0xe8] sm:$0xff]
    %v677 = vld [vmem:[%s3 + $0xf0] sm:$0xff]
    %v678 = vld [vmem:[%s3 + $0xf8] sm:$0xff]
    %v679 = vld [vmem:[%s2] sm:$0x1]
    %v681 = vperm.slane %v679, 0
    %v683 = vadd.f32 %v647, %v681
    %v684 = vadd.f32 %v648, %v681
    %v685 = vadd.f32 %v649, %v681
    %v686 = vadd.f32 %v650, %v681
    %v687 = vadd.f32 %v651, %v681
    %v688 = vadd.f32 %v652, %v681
    %v689 = vadd.f32 %v653, %v681
    %v690 = vadd.f32 %v654, %v681
    %v691 = vadd.f32 %v655, %v681
    %v692 = vadd.f32 %v656, %v681
    %v693 = vadd.f32 %v657, %v681
    %v694 = vadd.f32 %v658, %v681
    %v695 = vadd.f32 %v659, %v681
    %v696 = vadd.f32 %v660, %v681
    %v697 = vadd.f32 %v661, %v681
    %v698 = vadd.f32 %v662, %v681
    %v699 = vadd.f32 %v663, %v681
    %v700 = vadd.f32 %v664, %v681
    %v701 = vadd.f32 %v665, %v681
    %v702 = vadd.f32 %v666, %v681
    %v703 = vadd.f32 %v667, %v681
    %v704 = vadd.f32 %v668, %v681
    %v705 = vadd.f32 %v669, %v681
    %v706 = vadd.f32 %v670, %v681
    %v707 = vadd.f32 %v671, %v681
    %v708 = vadd.f32 %v672, %v681
    %v709 = vadd.f32 %v673, %v681
    %v710 = vadd.f32 %v674, %v681
    %v711 = vadd.f32 %v675, %v681
    %v712 = vadd.f32 %v676, %v681
    %v713 = vadd.f32 %v677, %v681
    %v714 = vadd.f32 %v678, %v681
    %715 = vst [vmem:[%s3] sm:$0xff] %v683
    %716 = vst [vmem:[%s3 + $0x8] sm:$0xff] %v684
    %717 = vst [vmem:[%s3 + $0x10] sm:$0xff] %v685
    %718 = vst [vmem:[%s3 + $0x18] sm:$0xff] %v686
    %719 = vst [vmem:[%s3 + $0x20] sm:$0xff] %v687
    %720 = vst [vmem:[%s3 + $0x28] sm:$0xff] %v688
    %721 = vst [vmem:[%s3 + $0x30] sm:$0xff] %v689
    %722 = vst [vmem:[%s3 + $0x38] sm:$0xff] %v690
    %723 = vst [vmem:[%s3 + $0x40] sm:$0xff] %v691
    %724 = vst [vmem:[%s3 + $0x48] sm:$0xff] %v692
    %725 = vst [vmem:[%s3 + $0x50] sm:$0xff] %v693
    %726 = vst [vmem:[%s3 + $0x58] sm:$0xff] %v694
    %727 = vst [vmem:[%s3 + $0x60] sm:$0xff] %v695
    %728 = vst [vmem:[%s3 + $0x68] sm:$0xff] %v696
    %729 = vst [vmem:[%s3 + $0x70] sm:$0xff] %v697
    %730 = vst [vmem:[%s3 + $0x78] sm:$0xff] %v698
    %731 = vst [vmem:[%s3 + $0x80] sm:$0xff] %v699
    %732 = vst [vmem:[%s3 + $0x88] sm:$0xff] %v700
    %733 = vst [vmem:[%s3 + $0x90] sm:$0xff] %v701
    %734 = vst [vmem:[%s3 + $0x98] sm:$0xff] %v702
    %735 = vst [vmem:[%s3 + $0xa0] sm:$0xff] %v703
    %736 = vst [vmem:[%s3 + $0xa8] sm:$0xff] %v704
    %737 = vst [vmem:[%s3 + $0xb0] sm:$0xff] %v705
    %738 = vst [vmem:[%s3 + $0xb8] sm:$0xff] %v706
    %739 = vst [vmem:[%s3 + $0xc0] sm:$0xff] %v707
    %740 = vst [vmem:[%s3 + $0xc8] sm:$0xff] %v708
    %741 = vst [vmem:[%s3 + $0xd0] sm:$0xff] %v709
    %742 = vst [vmem:[%s3 + $0xd8] sm:$0xff] %v710
    %743 = vst [vmem:[%s3 + $0xe0] sm:$0xff] %v711
    %744 = vst [vmem:[%s3 + $0xe8] sm:$0xff] %v712
    %745 = vst [vmem:[%s3 + $0xf0] sm:$0xff] %v713
    %746 = vst [vmem:[%s3 + $0xf8] sm:$0xff] %v714
  $region21: #{gcn_layer_forward.2} parent=0 // pred_fallthru
    _
  // Predicated region
  $region22: #{gcn_layer_forward.2} parent=0 // pred_check
    _
  $region23: #{gcn_layer_forward.2} parent=0 // pred_check_branch
    %748 = sbr.rel (0) target = $region25
  $region24: #{gcn_layer_forward.2} parent=0 // pred_region
    _
  $region25: #{gcn_layer_forward.2} parent=0 // pred_fallthru
    _
  // Predicated region
  $region26: #{gcn_layer_forward.2} parent=0 // pred_check
    _
  $region27: #{gcn_layer_forward.2} parent=0 // pred_check_branch
    %750 = sbr.rel (0) target = $region29
  $region28: #{gcn_layer_forward.2} parent=0 // pred_region
    _
  $region29: #{gcn_layer_forward.2} parent=0 // pred_fallthru
    _

</llo_original>
